<compile_context>
chip_gen: v7x
topology: tpu7x:2x2x1
jax: 0.10.0
libtpu: 0.0.40
codegen_flags: <defaults>
</compile_context>

<pallas_src>
import jax
import jax.numpy as jnp
from jax.experimental import pallas as pl
from jax.experimental.pallas import tpu as pltpu

HIDDEN = 128
SUBLANE = 8            # f32 sublane count (second-to-last dim granularity)
DEFAULT_TILE_B = 1024  # big tiles: per-grid-step overhead dominates at small tiles
FMA_K_MAX = 16         # below this, layer 1 uses VPU broadcast-FMAs instead of the MXU


def _round_up(v, m):
    return ((v + m - 1) // m) * m


def qnet_kernel(x_ref, w1_ref, b1_ref, w2_ref, b2_ref, w3_ref, b3_ref, o_ref):
    wdt = w1_ref.dtype
    # Exact f32 matmuls only in f32-weight mode (correctness test); bf16 weights use the
    # fast single-pass MXU path with f32 accumulation.
    prec = jax.lax.Precision.HIGHEST if wdt == jnp.float32 else None

    x = x_ref[...]
    tb, d_in = x.shape

    if d_in <= FMA_K_MAX:
        # K is tiny (dim_states=4): a handful of VPU broadcast-FMAs is essentially free
        # next to the two real 128x128 matmuls and avoids an MXU pass at <4% utilization.
        w1 = w1_ref[...].astype(jnp.float32)
        h1 = jnp.broadcast_to(b1_ref[...].astype(jnp.float32), (tb, w1.shape[1]))
        for k in range(d_in):  # static unroll
            h1 = h1 + x[:, k:k + 1].astype(jnp.float32) * w1[k:k + 1, :]
    else:
        h1 = jnp.dot(x.astype(wdt), w1_ref[...],
                     preferred_element_type=jnp.float32,
                     precision=prec) + b1_ref[...].astype(jnp.float32)
    h1 = jnp.maximum(h1, 0.0)

    h2 = jnp.dot(h1.astype(wdt), w2_ref[...],
                 preferred_element_type=jnp.float32,
                 precision=prec) + b2_ref[...].astype(jnp.float32)
    h2 = jnp.maximum(h2, 0.0)

    out = jnp.dot(h2.astype(wdt), w3_ref[...],
                  preferred_element_type=jnp.float32,
                  precision=prec) + b3_ref[...].astype(jnp.float32)
    o_ref[...] = out.astype(o_ref.dtype)


def _choose_batch_tiling(B, tile_b):
    """Pick (tile_rows, padded_batch, num_tiles) minimizing tail padding and giving the
    grid >= 2 steps when there is enough work (so both v7x TensorCores are used)."""
    b8 = _round_up(max(B, 1), SUBLANE)
    n = max(pl.cdiv(b8, tile_b), 1)
    if n == 1 and b8 >= 2 * SUBLANE:
        n = 2
    tb = _round_up(pl.cdiv(b8, n), SUBLANE)
    return tb, tb * n, n


def qnet_forward(x, params, *, tile_b=DEFAULT_TILE_B):
    """x: (B, dim_states) float32. params: dict of w1,b1,w2,b2,w3,b3 in (in, out) layout."""
    B, d_in = x.shape
    assert params["w1"].shape[0] == d_in
    d_act = params["w3"].shape[1]

    tb, b_pad, n_tiles = _choose_batch_tiling(B, tile_b)
    x_p = x if b_pad == B else jnp.pad(x, ((0, b_pad - B), (0, 0)))

    def rep(arr):
        # Full-array block, same block every grid step -> stays resident in VMEM.
        return pl.BlockSpec(arr.shape, lambda i: (0, 0))

    out = pl.pallas_call(
        qnet_kernel,
        out_shape=jax.ShapeDtypeStruct((b_pad, d_act), jnp.float32),
        grid=(n_tiles,),
        in_specs=[
            pl.BlockSpec((tb, d_in), lambda i: (i, 0)),   # x tiled over batch, real width
            rep(params["w1"]), rep(params["b1"]),
            rep(params["w2"]), rep(params["b2"]),
            rep(params["w3"]), rep(params["b3"]),
        ],
        out_specs=pl.BlockSpec((tb, d_act), lambda i: (i, 0)),  # real (narrow) output width
        compiler_params=pltpu.CompilerParams(
            dimension_semantics=("parallel",),   # batch tiles shard across TCs (megacore)
        ),
    )(x_p, params["w1"], params["b1"], params["w2"], params["b2"],
      params["w3"], params["b3"])

    return out if b_pad == B else out[:B]


def init_qnet_params(key, dim_states, dim_actions, weight_dtype=jnp.bfloat16):
    """Deterministic init mirroring nn.Linear's U(-1/sqrt(fan_in), 1/sqrt(fan_in)).
    Weights are stored transposed relative to PyTorch: shape (in, out), pre-cast to
    `weight_dtype` (bf16 default for the fast MXU path). Biases stay f32 and are added
    after f32 accumulation."""
    ks = jax.random.split(key, 6)

    def linear(kw, kb, fan_in, fan_out):
        bound = 1.0 / jnp.sqrt(jnp.float32(fan_in))
        w = jax.random.uniform(kw, (fan_in, fan_out), jnp.float32, -bound, bound)
        b = jax.random.uniform(kb, (1, fan_out), jnp.float32, -bound, bound)
        return w.astype(weight_dtype), b

    w1, b1 = linear(ks[0], ks[1], dim_states, HIDDEN)
    w2, b2 = linear(ks[2], ks[3], HIDDEN, HIDDEN)
    w3, b3 = linear(ks[4], ks[5], HIDDEN, dim_actions)
    return {"w1": w1, "b1": b1, "w2": w2, "b2": b2, "w3": w3, "b3": b3}


def qnet_reference(x, params):
    prec = jax.lax.Precision.HIGHEST
    h1 = jnp.maximum(
        jnp.dot(x, params["w1"].astype(jnp.float32), precision=prec) + params["b1"], 0.0)
    h2 = jnp.maximum(
        jnp.dot(h1, params["w2"].astype(jnp.float32), precision=prec) + params["b2"], 0.0)
    return jnp.dot(h2, params["w3"].astype(jnp.float32), precision=prec) + params["b3"]


# TODO(synk): sample_action's epsilon-greedy branch (python `random` + .argmax().item())
# is host-side control flow, not a kernel op; apply argmax/epsilon outside the kernel.

if __name__ == "__main__":
    key = jax.random.PRNGKey(0)
    k_param, k_x1, k_x2 = jax.random.split(key, 3)

    dim_states = 4    # e.g. CartPole observation dim
    dim_actions = 2   # e.g. CartPole action dim

    # --- exactness check: f32 weights, precision=HIGHEST everywhere ---
    params_f32 = init_qnet_params(k_param, dim_states, dim_actions,
                                  weight_dtype=jnp.float32)

    # Small batch (padded to 8 rows, single tile).
    x_small = jax.random.normal(k_x1, (2, dim_states), jnp.float32)
    out_small = jax.block_until_ready(qnet_forward(x_small, params_f32))
    ref_small = qnet_reference(x_small, params_f32)
    assert out_small.shape == (2, dim_actions)
    assert jnp.allclose(out_small, ref_small, atol=1e-5, rtol=1e-5), \
        "Pallas output mismatch vs reference (small batch, f32)"

    # Ragged batch: 300 rows -> 2 tiles of 152 rows (minimal tail padding, >=2 grid steps).
    x_big = jax.random.normal(k_x2, (300, dim_states), jnp.float32)
    out_big = jax.block_until_ready(qnet_forward(x_big, params_f32))
    ref_big = qnet_reference(x_big, params_f32)
    assert out_big.shape == (300, dim_actions)
    assert jnp.allclose(out_big, ref_big, atol=1e-5, rtol=1e-5), \
        "Pallas output mismatch vs reference (tiled batch, f32)"

    # --- fast path smoke test: default bf16 weights (f32 accumulation), loose tolerance ---
    params_bf16 = init_qnet_params(k_param, dim_states, dim_actions)  # bf16 default
    out_bf16 = jax.block_until_ready(qnet_forward(x_big, params_bf16))
    ref_bf16 = qnet_reference(x_big, params_bf16)
    assert out_bf16.shape == (300, dim_actions)
    assert jnp.allclose(out_bf16, ref_bf16, atol=5e-2, rtol=5e-2), \
        "Pallas output mismatch vs reference (bf16 weights)"

    print("KERNEL_OK")
</pallas_src>

<mosaic_0001>
module attributes {stable_mosaic.version = 11 : i64} {
  func.func @qnet_kernel(%arg0: i32, %arg1: memref<8x4xf32, #tpu.memory_space<vmem>>, %arg2: memref<4x128xf32, #tpu.memory_space<vmem>>, %arg3: memref<1x128xf32, #tpu.memory_space<vmem>>, %arg4: memref<128x128xf32, #tpu.memory_space<vmem>>, %arg5: memref<1x128xf32, #tpu.memory_space<vmem>>, %arg6: memref<128x2xf32, #tpu.memory_space<vmem>>, %arg7: memref<1x2xf32, #tpu.memory_space<vmem>>, %arg8: memref<8x2xf32, #tpu.memory_space<vmem>>) attributes {dimension_semantics = [#tpu.dimension_semantics<parallel>], iteration_bounds = array<i64: 1>, scalar_prefetch = 0 : i64, scratch_operands = 0 : i64, tpu.core_type = #tpu.core_type<tc>, window_params = [{transform_indices = @transform_0, window_bounds = array<i64: 8, 4>}, {pipeline_mode = #tpu.pipeline_mode<synchronous>, transform_indices = @transform_1, window_bounds = array<i64: 4, 128>}, {pipeline_mode = #tpu.pipeline_mode<synchronous>, transform_indices = @transform_2, window_bounds = array<i64: 1, 128>}, {pipeline_mode = #tpu.pipeline_mode<synchronous>, transform_indices = @transform_3, window_bounds = array<i64: 128, 128>}, {pipeline_mode = #tpu.pipeline_mode<synchronous>, transform_indices = @transform_4, window_bounds = array<i64: 1, 128>}, {pipeline_mode = #tpu.pipeline_mode<synchronous>, transform_indices = @transform_5, window_bounds = array<i64: 128, 2>}, {pipeline_mode = #tpu.pipeline_mode<synchronous>, transform_indices = @transform_6, window_bounds = array<i64: 1, 2>}, {transform_indices = @transform_7, window_bounds = array<i64: 8, 2>}]} {
    %c0 = arith.constant 0 : index
    %c0_0 = arith.constant 0 : index
    %0 = vector.load %arg1[%c0, %c0_0] : memref<8x4xf32, #tpu.memory_space<vmem>>, vector<8x4xf32>
    %c0_1 = arith.constant 0 : index
    %c0_2 = arith.constant 0 : index
    %1 = vector.load %arg2[%c0_1, %c0_2] : memref<4x128xf32, #tpu.memory_space<vmem>>, vector<4x128xf32>
    %c0_3 = arith.constant 0 : index
    %c0_4 = arith.constant 0 : index
    %2 = vector.load %arg3[%c0_3, %c0_4] : memref<1x128xf32, #tpu.memory_space<vmem>>, vector<1x128xf32>
    %3 = vector.shape_cast %2 : vector<1x128xf32> to vector<1x128xf32>
    %4 = vector.broadcast %3 : vector<1x128xf32> to vector<8x128xf32>
    %5 = vector.extract_strided_slice %0 {offsets = [0, 0], sizes = [8, 1], strides = [1, 1]} : vector<8x4xf32> to vector<8x1xf32>
    %6 = vector.extract_strided_slice %1 {offsets = [0, 0], sizes = [1, 128], strides = [1, 1]} : vector<4x128xf32> to vector<1x128xf32>
    %7 = vector.broadcast %5 : vector<8x1xf32> to vector<8x128xf32>
    %8 = vector.broadcast %6 : vector<1x128xf32> to vector<8x128xf32>
    %9 = arith.mulf %7, %8 : vector<8x128xf32>
    %10 = arith.addf %4, %9 : vector<8x128xf32>
    %11 = vector.extract_strided_slice %0 {offsets = [0, 1], sizes = [8, 1], strides = [1, 1]} : vector<8x4xf32> to vector<8x1xf32>
    %12 = vector.extract_strided_slice %1 {offsets = [1, 0], sizes = [1, 128], strides = [1, 1]} : vector<4x128xf32> to vector<1x128xf32>
    %13 = vector.broadcast %11 : vector<8x1xf32> to vector<8x128xf32>
    %14 = vector.broadcast %12 : vector<1x128xf32> to vector<8x128xf32>
    %15 = arith.mulf %13, %14 : vector<8x128xf32>
    %16 = arith.addf %10, %15 : vector<8x128xf32>
    %17 = vector.extract_strided_slice %0 {offsets = [0, 2], sizes = [8, 1], strides = [1, 1]} : vector<8x4xf32> to vector<8x1xf32>
    %18 = vector.extract_strided_slice %1 {offsets = [2, 0], sizes = [1, 128], strides = [1, 1]} : vector<4x128xf32> to vector<1x128xf32>
    %19 = vector.broadcast %17 : vector<8x1xf32> to vector<8x128xf32>
    %20 = vector.broadcast %18 : vector<1x128xf32> to vector<8x128xf32>
    %21 = arith.mulf %19, %20 : vector<8x128xf32>
    %22 = arith.addf %16, %21 : vector<8x128xf32>
    %23 = vector.extract_strided_slice %0 {offsets = [0, 3], sizes = [8, 1], strides = [1, 1]} : vector<8x4xf32> to vector<8x1xf32>
    %24 = vector.extract_strided_slice %1 {offsets = [3, 0], sizes = [1, 128], strides = [1, 1]} : vector<4x128xf32> to vector<1x128xf32>
    %25 = vector.broadcast %23 : vector<8x1xf32> to vector<8x128xf32>
    %26 = vector.broadcast %24 : vector<1x128xf32> to vector<8x128xf32>
    %27 = arith.mulf %25, %26 : vector<8x128xf32>
    %28 = arith.addf %22, %27 : vector<8x128xf32>
    %cst = arith.constant 0.000000e+00 : f32
    %29 = vector.broadcast %cst : f32 to vector<8x128xf32>
    %30 = arith.maximumf %28, %29 : vector<8x128xf32>
    %c0_5 = arith.constant 0 : index
    %c0_6 = arith.constant 0 : index
    %31 = vector.load %arg4[%c0_5, %c0_6] : memref<128x128xf32, #tpu.memory_space<vmem>>, vector<128x128xf32>
    %cst_7 = arith.constant dense<0.000000e+00> : vector<8x128xf32>
    %32 = tpu.matmul %30, %31, %cst_7 {dimension_numbers = #tpu.dot_dimension_numbers<[1], [0], [0], [1], [0, 0, 1, 1], [], []>, precision = #tpu.contract_precision<fp32>} : vector<8x128xf32>, vector<128x128xf32>, vector<8x128xf32> -> vector<8x128xf32>
    %c0_8 = arith.constant 0 : index
    %c0_9 = arith.constant 0 : index
    %33 = vector.load %arg5[%c0_8, %c0_9] : memref<1x128xf32, #tpu.memory_space<vmem>>, vector<1x128xf32>
    %34 = vector.broadcast %33 : vector<1x128xf32> to vector<8x128xf32>
    %35 = arith.addf %32, %34 : vector<8x128xf32>
    %cst_10 = arith.constant 0.000000e+00 : f32
    %36 = vector.broadcast %cst_10 : f32 to vector<8x128xf32>
    %37 = arith.maximumf %35, %36 : vector<8x128xf32>
    %c0_11 = arith.constant 0 : index
    %c0_12 = arith.constant 0 : index
    %38 = vector.load %arg6[%c0_11, %c0_12] : memref<128x2xf32, #tpu.memory_space<vmem>>, vector<128x2xf32>
    %cst_13 = arith.constant dense<0.000000e+00> : vector<8x2xf32>
    %39 = tpu.matmul %37, %38, %cst_13 {dimension_numbers = #tpu.dot_dimension_numbers<[1], [0], [0], [1], [0, 0, 1, 1], [], []>, precision = #tpu.contract_precision<fp32>} : vector<8x128xf32>, vector<128x2xf32>, vector<8x2xf32> -> vector<8x2xf32>
    %c0_14 = arith.constant 0 : index
    %c0_15 = arith.constant 0 : index
    %40 = vector.load %arg7[%c0_14, %c0_15] : memref<1x2xf32, #tpu.memory_space<vmem>>, vector<1x2xf32>
    %41 = vector.broadcast %40 : vector<1x2xf32> to vector<8x2xf32>
    %42 = arith.addf %39, %41 : vector<8x2xf32>
    %c0_16 = arith.constant 0 : index
    %c0_17 = arith.constant 0 : index
    %43 = vector.load %arg8[%c0_16, %c0_17] : memref<8x2xf32, #tpu.memory_space<vmem>>, vector<8x2xf32>
    tpu.vector_store %arg8[%c0_16, %c0_17], %42 {strides = array<i32>} : memref<8x2xf32, #tpu.memory_space<vmem>>, vector<8x2xf32>,
    return
  }
  func.func @transform_0(%arg0: i32) -> (i32, i32) {
    %c0_i32 = arith.constant 0 : i32
    %c0_i32_0 = arith.constant 0 : i32
    return %arg0, %c0_i32 : i32, i32
  }
  func.func @transform_1(%arg0: i32) -> (i32, i32) {
    %c0_i32 = arith.constant 0 : i32
    %c0_i32_0 = arith.constant 0 : i32
    %c0_i32_1 = arith.constant 0 : i32
    return %c0_i32, %c0_i32_0 : i32, i32
  }
  func.func @transform_2(%arg0: i32) -> (i32, i32) {
    %c0_i32 = arith.constant 0 : i32
    %c0_i32_0 = arith.constant 0 : i32
    %c0_i32_1 = arith.constant 0 : i32
    return %c0_i32, %c0_i32_0 : i32, i32
  }
  func.func @transform_3(%arg0: i32) -> (i32, i32) {
    %c0_i32 = arith.constant 0 : i32
    %c0_i32_0 = arith.constant 0 : i32
    %c0_i32_1 = arith.constant 0 : i32
    return %c0_i32, %c0_i32_0 : i32, i32
  }
  func.func @transform_4(%arg0: i32) -> (i32, i32) {
    %c0_i32 = arith.constant 0 : i32
    %c0_i32_0 = arith.constant 0 : i32
    %c0_i32_1 = arith.constant 0 : i32
    return %c0_i32, %c0_i32_0 : i32, i32
  }
  func.func @transform_5(%arg0: i32) -> (i32, i32) {
    %c0_i32 = arith.constant 0 : i32
    %c0_i32_0 = arith.constant 0 : i32
    %c0_i32_1 = arith.constant 0 : i32
    return %c0_i32, %c0_i32_0 : i32, i32
  }
  func.func @transform_6(%arg0: i32) -> (i32, i32) {
    %c0_i32 = arith.constant 0 : i32
    %c0_i32_0 = arith.constant 0 : i32
    %c0_i32_1 = arith.constant 0 : i32
    return %c0_i32, %c0_i32_0 : i32, i32
  }
  func.func @transform_7(%arg0: i32) -> (i32, i32) {
    %c0_i32 = arith.constant 0 : i32
    %c0_i32_0 = arith.constant 0 : i32
    return %arg0, %c0_i32 : i32, i32
  }
}

</mosaic_0001>

<llo_original>
// kernel: tpu_custom_call.1
$region0: #{tpu_custom_call.1}
  #allocation0 [shape = 'u32[]', space=smem, size = 0x4, offset = 0x4, fixed_abs, tag = 'smem constant byte address 0x4 - core index']
  #allocation1 [shape = 'u32[144,128]{1,0:T(1,128)}', space=vmem, size = 0x12000, scoped, tag = 'internal scratch']
  %s0 = inlined_call_operand.vmem [shape: f32[8,4], index: 0, kind: input, shape index: {}]
  %s1 = inlined_call_operand.vmem [shape: f32[4,128], index: 1, kind: input, shape index: {}]
  %s2 = inlined_call_operand.vmem [shape: f32[1,128], index: 2, kind: input, shape index: {}]
  %s3 = inlined_call_operand.vmem [shape: f32[128,128], index: 3, kind: input, shape index: {}]
  %s4 = inlined_call_operand.vmem [shape: f32[1,128], index: 4, kind: input, shape index: {}]
  %s5 = inlined_call_operand.vmem [shape: f32[128,2], index: 5, kind: input, shape index: {}]
  %s6 = inlined_call_operand.vmem [shape: f32[1,2], index: 6, kind: input, shape index: {}]
  %s7 = inlined_call_operand.vmem [shape: f32[8,2], index: 7, kind: output, shape index: {}]
  %s8 = sld [smem:[#allocation0]]
  $region38: #{tpu_custom_call.1} parent=0
    _
  %s10 = ssub.s32 1, %s8
  %s11 = scalar_select 0, %s10, %s8
  // Predicated region
  $region2: #{tpu_custom_call.1} parent=0 // pred_check
    _
  $region3: #{tpu_custom_call.1} parent=0 // pred_check_branch
    %13 = sbr.rel (0) target = $region5
  $region4: #{tpu_custom_call.1} parent=0 // pred_region
    _
  $region5: #{tpu_custom_call.1} parent=0 // pred_fallthru
    _
  // Predicated region
  $region6: #{tpu_custom_call.1} parent=0 // pred_check
    _
  $region7: #{tpu_custom_call.1} parent=0 // pred_check_branch
    %15 = sbr.rel (0) target = $region9
  $region8: #{tpu_custom_call.1} parent=0 // pred_region
    _
  $region9: #{tpu_custom_call.1} parent=0 // pred_fallthru
    _
  // Predicated region
  $region10: #{tpu_custom_call.1} parent=0 // pred_check
    _
  $region11: #{tpu_custom_call.1} parent=0 // pred_check_branch
    %17 = sbr.rel (0) target = $region13
  $region12: #{tpu_custom_call.1} parent=0 // pred_region
    _
  $region13: #{tpu_custom_call.1} parent=0 // pred_fallthru
    _
  // Predicated region
  $region14: #{tpu_custom_call.1} parent=0 // pred_check
    _
  $region15: #{tpu_custom_call.1} parent=0 // pred_check_branch
    %19 = sbr.rel (0) target = $region17
  $region16: #{tpu_custom_call.1} parent=0 // pred_region
    _
  $region17: #{tpu_custom_call.1} parent=0 // pred_fallthru
    _
  // Predicated region
  $region18: #{tpu_custom_call.1} parent=0 // pred_check
    _
  $region19: #{tpu_custom_call.1} parent=0 // pred_check_branch
    %21 = sbr.rel (0) target = $region21
  $region20: #{tpu_custom_call.1} parent=0 // pred_region
    _
  $region21: #{tpu_custom_call.1} parent=0 // pred_fallthru
    _
  // Predicated region
  $region22: #{tpu_custom_call.1} parent=0 // pred_check
    _
  $region23: #{tpu_custom_call.1} parent=0 // pred_check_branch
    %23 = sbr.rel (0) target = $region25
  $region24: #{tpu_custom_call.1} parent=0 // pred_region
    _
  $region25: #{tpu_custom_call.1} parent=0 // pred_fallthru
    _
  // Predicated region
  $region26: #{tpu_custom_call.1} parent=0 // pred_check
    _
  $region27: #{tpu_custom_call.1} parent=0 // pred_check_branch
    %25 = sbr.rel (0) target = $region29
  $region28: #{tpu_custom_call.1} parent=0 // pred_region
    _
  $region29: #{tpu_custom_call.1} parent=0 // pred_fallthru
    _
  %v26 = vld [vmem:[%s0] sm:$0xff]
  %v27 = vld [vmem:[%s1] sm:$0xf]
  %v28 = vld [vmem:[%s2] sm:$0x1]
  %v30 = vlaneseq
  %v31 = vshrl.u32 %v30, 7
  %v32 = vsub.s32 0, %v31
  %v33 = vrot.slane %v28, %v32
  %36 = vset.pattern.permute.xlu0 0
  %37 = vperm.xlu0 %36, %v26
  %v38 = vpop.permute.xlu0 %37
  %v40 = vlaneseq
  %v41 = vshrl.u32 %v40, 7
  %v42 = vsub.s32 0, %v41
  %v43 = vrot.slane %v27, %v42
  %v44 = vmul.f32 %v38, %v43
  %v45 = vadd.f32 %v33, %v44
  %46 = vset.pattern.permute.xlu0 1
  %47 = vperm.xlu0 %46, %v26
  %v48 = vpop.permute.xlu0 %47
  %v50 = vlaneseq
  %v51 = vshrl.u32 %v50, 7
  %v52 = vsub.s32 1, %v51
  %v53 = vrot.slane %v27, %v52
  %v54 = vmul.f32 %v48, %v53
  %v55 = vadd.f32 %v45, %v54
  %56 = vset.pattern.permute.xlu0 2
  %57 = vperm.xlu0 %56, %v26
  %v58 = vpop.permute.xlu0 %57
  %v60 = vlaneseq
  %v61 = vshrl.u32 %v60, 7
  %v62 = vsub.s32 2, %v61
  %v63 = vrot.slane %v27, %v62
  %v64 = vmul.f32 %v58, %v63
  %v65 = vadd.f32 %v55, %v64
  %66 = vset.pattern.permute.xlu0 3
  %67 = vperm.xlu0 %66, %v26
  %v68 = vpop.permute.xlu0 %67
  %v70 = vlaneseq
  %v71 = vshrl.u32 %v70, 7
  %v72 = vsub.s32 3, %v71
  %v73 = vrot.slane %v27, %v72
  %v74 = vmul.f32 %v68, %v73
  %v75 = vadd.f32 %v65, %v74
  %v76 = vmax.f32 %v75, 0.0
  %v77 = vld [vmem:[%s3] sm:$0xff]
  %v78 = vld [vmem:[%s3 + $0x8] sm:$0xff]
  %v79 = vld [vmem:[%s3 + $0x10] sm:$0xff]
  %v80 = vld [vmem:[%s3 + $0x18] sm:$0xff]
  %v81 = vld [vmem:[%s3 + $0x20] sm:$0xff]
  %v82 = vld [vmem:[%s3 + $0x28] sm:$0xff]
  %v83 = vld [vmem:[%s3 + $0x30] sm:$0xff]
  %v84 = vld [vmem:[%s3 + $0x38] sm:$0xff]
  %v85 = vld [vmem:[%s3 + $0x40] sm:$0xff]
  %v86 = vld [vmem:[%s3 + $0x48] sm:$0xff]
  %v87 = vld [vmem:[%s3 + $0x50] sm:$0xff]
  %v88 = vld [vmem:[%s3 + $0x58] sm:$0xff]
  %v89 = vld [vmem:[%s3 + $0x60] sm:$0xff]
  %v90 = vld [vmem:[%s3 + $0x68] sm:$0xff]
  %v91 = vld [vmem:[%s3 + $0x70] sm:$0xff]
  %v92 = vld [vmem:[%s3 + $0x78] sm:$0xff]
  %v93 = vld [vmem:[%s4] sm:$0x1]
  %v95 = vlaneseq
  %v96 = vshrl.u32 %v95, 7
  %v97 = vsub.s32 0, %v96
  %v98 = vrot.slane %v93, %v97
  %100 = vmatprep.subr.mxu0 0.0
  %v101 = vand.u32 %v77, 4294901760
  %102 = vmatpush1.msra.mxu0 %v101
  %103 = vmatprep.subr.mxu0 0.0
  %v104 = vand.u32 %v78, 4294901760
  %105 = vmatpush1.msra.mxu0 %v104
  %106 = vmatprep.subr.mxu0 0.0
  %v107 = vand.u32 %v79, 4294901760
  %108 = vmatpush1.msra.mxu0 %v107
  %109 = vmatprep.subr.mxu0 0.0
  %v110 = vand.u32 %v80, 4294901760
  %111 = vmatpush1.msra.mxu0 %v110
  %112 = vmatprep.subr.mxu0 0.0
  %v113 = vand.u32 %v81, 4294901760
  %114 = vmatpush1.msra.mxu0 %v113
  %115 = vmatprep.subr.mxu0 0.0
  %v116 = vand.u32 %v82, 4294901760
  %117 = vmatpush1.msra.mxu0 %v116
  %118 = vmatprep.subr.mxu0 0.0
  %v119 = vand.u32 %v83, 4294901760
  %120 = vmatpush1.msra.mxu0 %v119
  %121 = vmatprep.subr.mxu0 0.0
  %v122 = vand.u32 %v84, 4294901760
  %123 = vmatpush1.msra.mxu0 %v122
  %124 = vmatprep.subr.mxu0 0.0
  %v125 = vand.u32 %v85, 4294901760
  %126 = vmatpush1.msra.mxu0 %v125
  %127 = vmatprep.subr.mxu0 0.0
  %v128 = vand.u32 %v86, 4294901760
  %129 = vmatpush1.msra.mxu0 %v128
  %130 = vmatprep.subr.mxu0 0.0
  %v131 = vand.u32 %v87, 4294901760
  %132 = vmatpush1.msra.mxu0 %v131
  %133 = vmatprep.subr.mxu0 0.0
  %v134 = vand.u32 %v88, 4294901760
  %135 = vmatpush1.msra.mxu0 %v134
  %136 = vmatprep.subr.mxu0 0.0
  %v137 = vand.u32 %v89, 4294901760
  %138 = vmatpush1.msra.mxu0 %v137
  %139 = vmatprep.subr.mxu0 0.0
  %v140 = vand.u32 %v90, 4294901760
  %141 = vmatpush1.msra.mxu0 %v140
  %142 = vmatprep.subr.mxu0 0.0
  %v143 = vand.u32 %v91, 4294901760
  %144 = vmatpush1.msra.mxu0 %v143
  %145 = vmatprep.subr.mxu0 0.0
  %v146 = vand.u32 %v92, 4294901760
  %147 = vmatpush1.msra.mxu0 %v146
  %148 = vmatprep.subr.mxu0 0.0
  %149 = vmatpush1.msra.mxu0 0.0
  %150 = vmatprep.subr.mxu0 0.0
  %151 = vmatpush1.msra.mxu0 0.0
  %152 = vmatprep.subr.mxu0 0.0
  %153 = vmatpush1.msra.mxu0 0.0
  %154 = vmatprep.subr.mxu0 0.0
  %155 = vmatpush1.msra.mxu0 0.0
  %156 = vmatprep.subr.mxu0 0.0
  %157 = vmatpush1.msra.mxu0 0.0
  %158 = vmatprep.subr.mxu0 0.0
  %159 = vmatpush1.msra.mxu0 0.0
  %160 = vmatprep.subr.mxu0 0.0
  %161 = vmatpush1.msra.mxu0 0.0
  %162 = vmatprep.subr.mxu0 0.0
  %163 = vmatpush1.msra.mxu0 0.0
  %164 = vmatprep.subr.mxu0 0.0
  %165 = vmatpush1.msra.mxu0 0.0
  %166 = vmatprep.subr.mxu0 0.0
  %167 = vmatpush1.msra.mxu0 0.0
  %168 = vmatprep.subr.mxu0 0.0
  %169 = vmatpush1.msra.mxu0 0.0
  %170 = vmatprep.subr.mxu0 0.0
  %171 = vmatpush1.msra.mxu0 0.0
  %172 = vmatprep.subr.mxu0 0.0
  %173 = vmatpush1.msra.mxu0 0.0
  %174 = vmatprep.subr.mxu0 0.0
  %175 = vmatpush1.msra.mxu0 0.0
  %176 = vmatprep.subr.mxu0 0.0
  %177 = vmatpush1.msra.mxu0 0.0
  %178 = vmatprep.subr.mxu0 0.0
  %179 = vmatpush1.msra.mxu0 0.0
  %180 = vmatprep.mubr.f32.mxu0 0.0
  %v181 = vand.u32 %v76, 4294901760
  %v182 = vsub.f32 %v76, %v181
  %v183 = vand.u32 %v182, 4294901760
  %v184 = vsub.f32 %v182, %v183
  %v185 = vand.u32 %v184, 4294901760
  %186 = vmatmul.mubr.f32.gmra.mrb[0].mxu0 %v185
  %v187 = vpop.f32.mrb[0].mxu0
  %v188 = vadd.f32 %v98, %v187
  %v189 = vpop.f32.mrb[0].mxu0
  %190 = vdwg.mxu0
  %191 = vmatprep.subr.mxu0 0.0
  %v192 = vand.u32 %v77, 4294901760
  %v193 = vsub.f32 %v77, %v192
  %v194 = vand.u32 %v193, 4294901760
  %v195 = vsub.f32 %v193, %v194
  %v196 = vand.u32 %v195, 4294901760
  %197 = vmatpush1.msra.mxu0 %v196
  %198 = vmatprep.subr.mxu0 0.0
  %v199 = vand.u32 %v78, 4294901760
  %v200 = vsub.f32 %v78, %v199
  %v201 = vand.u32 %v200, 4294901760
  %v202 = vsub.f32 %v200, %v201
  %v203 = vand.u32 %v202, 4294901760
  %204 = vmatpush1.msra.mxu0 %v203
  %205 = vmatprep.subr.mxu0 0.0
  %v206 = vand.u32 %v79, 4294901760
  %v207 = vsub.f32 %v79, %v206
  %v208 = vand.u32 %v207, 4294901760
  %v209 = vsub.f32 %v207, %v208
  %v210 = vand.u32 %v209, 4294901760
  %211 = vmatpush1.msra.mxu0 %v210
  %212 = vmatprep.subr.mxu0 0.0
  %v213 = vand.u32 %v80, 4294901760
  %v214 = vsub.f32 %v80, %v213
  %v215 = vand.u32 %v214, 4294901760
  %v216 = vsub.f32 %v214, %v215
  %v217 = vand.u32 %v216, 4294901760
  %218 = vmatpush1.msra.mxu0 %v217
  %219 = vmatprep.subr.mxu0 0.0
  %v220 = vand.u32 %v81, 4294901760
  %v221 = vsub.f32 %v81, %v220
  %v222 = vand.u32 %v221, 4294901760
  %v223 = vsub.f32 %v221, %v222
  %v224 = vand.u32 %v223, 4294901760
  %225 = vmatpush1.msra.mxu0 %v224
  %226 = vmatprep.subr.mxu0 0.0
  %v227 = vand.u32 %v82, 4294901760
  %v228 = vsub.f32 %v82, %v227
  %v229 = vand.u32 %v228, 4294901760
  %v230 = vsub.f32 %v228, %v229
  %v231 = vand.u32 %v230, 4294901760
  %232 = vmatpush1.msra.mxu0 %v231
  %233 = vmatprep.subr.mxu0 0.0
  %v234 = vand.u32 %v83, 4294901760
  %v235 = vsub.f32 %v83, %v234
  %v236 = vand.u32 %v235, 4294901760
  %v237 = vsub.f32 %v235, %v236
  %v238 = vand.u32 %v237, 4294901760
  %239 = vmatpush1.msra.mxu0 %v238
  %240 = vmatprep.subr.mxu0 0.0
  %v241 = vand.u32 %v84, 4294901760
  %v242 = vsub.f32 %v84, %v241
  %v243 = vand.u32 %v242, 4294901760
  %v244 = vsub.f32 %v242, %v243
  %v245 = vand.u32 %v244, 4294901760
  %246 = vmatpush1.msra.mxu0 %v245
  %247 = vmatprep.subr.mxu0 0.0
  %v248 = vand.u32 %v85, 4294901760
  %v249 = vsub.f32 %v85, %v248
  %v250 = vand.u32 %v249, 4294901760
  %v251 = vsub.f32 %v249, %v250
  %v252 = vand.u32 %v251, 4294901760
  %253 = vmatpush1.msra.mxu0 %v252
  %254 = vmatprep.subr.mxu0 0.0
  %v255 = vand.u32 %v86, 4294901760
  %v256 = vsub.f32 %v86, %v255
  %v257 = vand.u32 %v256, 4294901760
  %v258 = vsub.f32 %v256, %v257
  %v259 = vand.u32 %v258, 4294901760
  %260 = vmatpush1.msra.mxu0 %v259
  %261 = vmatprep.subr.mxu0 0.0
  %v262 = vand.u32 %v87, 4294901760
  %v263 = vsub.f32 %v87, %v262
  %v264 = vand.u32 %v263, 4294901760
  %v265 = vsub.f32 %v263, %v264
  %v266 = vand.u32 %v265, 4294901760
  %267 = vmatpush1.msra.mxu0 %v266
  %268 = vmatprep.subr.mxu0 0.0
  %v269 = vand.u32 %v88, 4294901760
  %v270 = vsub.f32 %v88, %v269
  %v271 = vand.u32 %v270, 4294901760
  %v272 = vsub.f32 %v270, %v271
  %v273 = vand.u32 %v272, 4294901760
  %274 = vmatpush1.msra.mxu0 %v273
  %275 = vmatprep.subr.mxu0 0.0
  %v276 = vand.u32 %v89, 4294901760
  %v277 = vsub.f32 %v89, %v276
  %v278 = vand.u32 %v277, 4294901760
  %v279 = vsub.f32 %v277, %v278
  %v280 = vand.u32 %v279, 4294901760
  %281 = vmatpush1.msra.mxu0 %v280
  %282 = vmatprep.subr.mxu0 0.0
  %v283 = vand.u32 %v90, 4294901760
  %v284 = vsub.f32 %v90, %v283
  %v285 = vand.u32 %v284, 4294901760
  %v286 = vsub.f32 %v284, %v285
  %v287 = vand.u32 %v286, 4294901760
  %288 = vmatpush1.msra.mxu0 %v287
  %289 = vmatprep.subr.mxu0 0.0
  %v290 = vand.u32 %v91, 4294901760
  %v291 = vsub.f32 %v91, %v290
  %v292 = vand.u32 %v291, 4294901760
  %v293 = vsub.f32 %v291, %v292
  %v294 = vand.u32 %v293, 4294901760
  %295 = vmatpush1.msra.mxu0 %v294
  %296 = vmatprep.subr.mxu0 0.0
  %v297 = vand.u32 %v92, 4294901760
  %v298 = vsub.f32 %v92, %v297
  %v299 = vand.u32 %v298, 4294901760
  %v300 = vsub.f32 %v298, %v299
  %v301 = vand.u32 %v300, 4294901760
  %302 = vmatpush1.msra.mxu0 %v301
  %303 = vmatprep.subr.mxu0 0.0
  %304 = vmatpush1.msra.mxu0 0.0
  %305 = vmatprep.subr.mxu0 0.0
  %306 = vmatpush1.msra.mxu0 0.0
  %307 = vmatprep.subr.mxu0 0.0
  %308 = vmatpush1.msra.mxu0 0.0
  %309 = vmatprep.subr.mxu0 0.0
  %310 = vmatpush1.msra.mxu0 0.0
  %311 = vmatprep.subr.mxu0 0.0
  %312 = vmatpush1.msra.mxu0 0.0
  %313 = vmatprep.subr.mxu0 0.0
  %314 = vmatpush1.msra.mxu0 0.0
  %315 = vmatprep.subr.mxu0 0.0
  %316 = vmatpush1.msra.mxu0 0.0
  %317 = vmatprep.subr.mxu0 0.0
  %318 = vmatpush1.msra.mxu0 0.0
  %319 = vmatprep.subr.mxu0 0.0
  %320 = vmatpush1.msra.mxu0 0.0
  %321 = vmatprep.subr.mxu0 0.0
  %322 = vmatpush1.msra.mxu0 0.0
  %323 = vmatprep.subr.mxu0 0.0
  %324 = vmatpush1.msra.mxu0 0.0
  %325 = vmatprep.subr.mxu0 0.0
  %326 = vmatpush1.msra.mxu0 0.0
  %327 = vmatprep.subr.mxu0 0.0
  %328 = vmatpush1.msra.mxu0 0.0
  %329 = vmatprep.subr.mxu0 0.0
  %330 = vmatpush1.msra.mxu0 0.0
  %331 = vmatprep.subr.mxu0 0.0
  %332 = vmatpush1.msra.mxu0 0.0
  %333 = vmatprep.subr.mxu0 0.0
  %334 = vmatpush1.msra.mxu0 0.0
  %335 = vmatprep.mubr.f32.mxu0 0.0
  %v336 = vand.u32 %v76, 4294901760
  %337 = vmatmul.mubr.f32.gmra.mrb[0].mxu0 %v336
  %v338 = vpop.f32.mrb[0].mxu0
  %v339 = vadd.f32 %v188, %v338
  %v340 = vpop.f32.mrb[0].mxu0
  %341 = vdwg.mxu0
  %342 = vmatprep.subr.mxu0 0.0
  %v343 = vand.u32 %v77, 4294901760
  %v344 = vsub.f32 %v77, %v343
  %345 = vmatpush1.msra.mxu0 %v344
  %346 = vmatprep.subr.mxu0 0.0
  %v347 = vand.u32 %v78, 4294901760
  %v348 = vsub.f32 %v78, %v347
  %349 = vmatpush1.msra.mxu0 %v348
  %350 = vmatprep.subr.mxu0 0.0
  %v351 = vand.u32 %v79, 4294901760
  %v352 = vsub.f32 %v79, %v351
  %353 = vmatpush1.msra.mxu0 %v352
  %354 = vmatprep.subr.mxu0 0.0
  %v355 = vand.u32 %v80, 4294901760
  %v356 = vsub.f32 %v80, %v355
  %357 = vmatpush1.msra.mxu0 %v356
  %358 = vmatprep.subr.mxu0 0.0
  %v359 = vand.u32 %v81, 4294901760
  %v360 = vsub.f32 %v81, %v359
  %361 = vmatpush1.msra.mxu0 %v360
  %362 = vmatprep.subr.mxu0 0.0
  %v363 = vand.u32 %v82, 4294901760
  %v364 = vsub.f32 %v82, %v363
  %365 = vmatpush1.msra.mxu0 %v364
  %366 = vmatprep.subr.mxu0 0.0
  %v367 = vand.u32 %v83, 4294901760
  %v368 = vsub.f32 %v83, %v367
  %369 = vmatpush1.msra.mxu0 %v368
  %370 = vmatprep.subr.mxu0 0.0
  %v371 = vand.u32 %v84, 4294901760
  %v372 = vsub.f32 %v84, %v371
  %373 = vmatpush1.msra.mxu0 %v372
  %374 = vmatprep.subr.mxu0 0.0
  %v375 = vand.u32 %v85, 4294901760
  %v376 = vsub.f32 %v85, %v375
  %377 = vmatpush1.msra.mxu0 %v376
  %378 = vmatprep.subr.mxu0 0.0
  %v379 = vand.u32 %v86, 4294901760
  %v380 = vsub.f32 %v86, %v379
  %381 = vmatpush1.msra.mxu0 %v380
  %382 = vmatprep.subr.mxu0 0.0
  %v383 = vand.u32 %v87, 4294901760
  %v384 = vsub.f32 %v87, %v383
  %385 = vmatpush1.msra.mxu0 %v384
  %386 = vmatprep.subr.mxu0 0.0
  %v387 = vand.u32 %v88, 4294901760
  %v388 = vsub.f32 %v88, %v387
  %389 = vmatpush1.msra.mxu0 %v388
  %390 = vmatprep.subr.mxu0 0.0
  %v391 = vand.u32 %v89, 4294901760
  %v392 = vsub.f32 %v89, %v391
  %393 = vmatpush1.msra.mxu0 %v392
  %394 = vmatprep.subr.mxu0 0.0
  %v395 = vand.u32 %v90, 4294901760
  %v396 = vsub.f32 %v90, %v395
  %397 = vmatpush1.msra.mxu0 %v396
  %398 = vmatprep.subr.mxu0 0.0
  %v399 = vand.u32 %v91, 4294901760
  %v400 = vsub.f32 %v91, %v399
  %401 = vmatpush1.msra.mxu0 %v400
  %402 = vmatprep.subr.mxu0 0.0
  %v403 = vand.u32 %v92, 4294901760
  %v404 = vsub.f32 %v92, %v403
  %405 = vmatpush1.msra.mxu0 %v404
  %406 = vmatprep.subr.mxu0 0.0
  %407 = vmatpush1.msra.mxu0 0.0
  %408 = vmatprep.subr.mxu0 0.0
  %409 = vmatpush1.msra.mxu0 0.0
  %410 = vmatprep.subr.mxu0 0.0
  %411 = vmatpush1.msra.mxu0 0.0
  %412 = vmatprep.subr.mxu0 0.0
  %413 = vmatpush1.msra.mxu0 0.0
  %414 = vmatprep.subr.mxu0 0.0
  %415 = vmatpush1.msra.mxu0 0.0
  %416 = vmatprep.subr.mxu0 0.0
  %417 = vmatpush1.msra.mxu0 0.0
  %418 = vmatprep.subr.mxu0 0.0
  %419 = vmatpush1.msra.mxu0 0.0
  %420 = vmatprep.subr.mxu0 0.0
  %421 = vmatpush1.msra.mxu0 0.0
  %422 = vmatprep.subr.mxu0 0.0
  %423 = vmatpush1.msra.mxu0 0.0
  %424 = vmatprep.subr.mxu0 0.0
  %425 = vmatpush1.msra.mxu0 0.0
  %426 = vmatprep.subr.mxu0 0.0
  %427 = vmatpush1.msra.mxu0 0.0
  %428 = vmatprep.subr.mxu0 0.0
  %429 = vmatpush1.msra.mxu0 0.0
  %430 = vmatprep.subr.mxu0 0.0
  %431 = vmatpush1.msra.mxu0 0.0
  %432 = vmatprep.subr.mxu0 0.0
  %433 = vmatpush1.msra.mxu0 0.0
  %434 = vmatprep.subr.mxu0 0.0
  %435 = vmatpush1.msra.mxu0 0.0
  %436 = vmatprep.subr.mxu0 0.0
  %437 = vmatpush1.msra.mxu0 0.0
  %438 = vmatprep.mubr.f32.mxu0 0.0
  %v439 = vand.u32 %v76, 4294901760
  %v440 = vsub.f32 %v76, %v439
  %441 = vmatmul.mubr.f32.gmra.mrb[0].mxu0 %v440
  %v442 = vpop.f32.mrb[0].mxu0
  %v443 = vadd.f32 %v339, %v442
  %v444 = vpop.f32.mrb[0].mxu0
  %445 = vdwg.mxu0
  %446 = vmatprep.subr.mxu0 0.0
  %v447 = vand.u32 %v77, 4294901760
  %448 = vmatpush1.msra.mxu0 %v447
  %449 = vmatprep.subr.mxu0 0.0
  %v450 = vand.u32 %v78, 4294901760
  %451 = vmatpush1.msra.mxu0 %v450
  %452 = vmatprep.subr.mxu0 0.0
  %v453 = vand.u32 %v79, 4294901760
  %454 = vmatpush1.msra.mxu0 %v453
  %455 = vmatprep.subr.mxu0 0.0
  %v456 = vand.u32 %v80, 4294901760
  %457 = vmatpush1.msra.mxu0 %v456
  %458 = vmatprep.subr.mxu0 0.0
  %v459 = vand.u32 %v81, 4294901760
  %460 = vmatpush1.msra.mxu0 %v459
  %461 = vmatprep.subr.mxu0 0.0
  %v462 = vand.u32 %v82, 4294901760
  %463 = vmatpush1.msra.mxu0 %v462
  %464 = vmatprep.subr.mxu0 0.0
  %v465 = vand.u32 %v83, 4294901760
  %466 = vmatpush1.msra.mxu0 %v465
  %467 = vmatprep.subr.mxu0 0.0
  %v468 = vand.u32 %v84, 4294901760
  %469 = vmatpush1.msra.mxu0 %v468
  %470 = vmatprep.subr.mxu0 0.0
  %v471 = vand.u32 %v85, 4294901760
  %472 = vmatpush1.msra.mxu0 %v471
  %473 = vmatprep.subr.mxu0 0.0
  %v474 = vand.u32 %v86, 4294901760
  %475 = vmatpush1.msra.mxu0 %v474
  %476 = vmatprep.subr.mxu0 0.0
  %v477 = vand.u32 %v87, 4294901760
  %478 = vmatpush1.msra.mxu0 %v477
  %479 = vmatprep.subr.mxu0 0.0
  %v480 = vand.u32 %v88, 4294901760
  %481 = vmatpush1.msra.mxu0 %v480
  %482 = vmatprep.subr.mxu0 0.0
  %v483 = vand.u32 %v89, 4294901760
  %484 = vmatpush1.msra.mxu0 %v483
  %485 = vmatprep.subr.mxu0 0.0
  %v486 = vand.u32 %v90, 4294901760
  %487 = vmatpush1.msra.mxu0 %v486
  %488 = vmatprep.subr.mxu0 0.0
  %v489 = vand.u32 %v91, 4294901760
  %490 = vmatpush1.msra.mxu0 %v489
  %491 = vmatprep.subr.mxu0 0.0
  %v492 = vand.u32 %v92, 4294901760
  %493 = vmatpush1.msra.mxu0 %v492
  %494 = vmatprep.subr.mxu0 0.0
  %495 = vmatpush1.msra.mxu0 0.0
  %496 = vmatprep.subr.mxu0 0.0
  %497 = vmatpush1.msra.mxu0 0.0
  %498 = vmatprep.subr.mxu0 0.0
  %499 = vmatpush1.msra.mxu0 0.0
  %500 = vmatprep.subr.mxu0 0.0
  %501 = vmatpush1.msra.mxu0 0.0
  %502 = vmatprep.subr.mxu0 0.0
  %503 = vmatpush1.msra.mxu0 0.0
  %504 = vmatprep.subr.mxu0 0.0
  %505 = vmatpush1.msra.mxu0 0.0
  %506 = vmatprep.subr.mxu0 0.0
  %507 = vmatpush1.msra.mxu0 0.0
  %508 = vmatprep.subr.mxu0 0.0
  %509 = vmatpush1.msra.mxu0 0.0
  %510 = vmatprep.subr.mxu0 0.0
  %511 = vmatpush1.msra.mxu0 0.0
  %512 = vmatprep.subr.mxu0 0.0
  %513 = vmatpush1.msra.mxu0 0.0
  %514 = vmatprep.subr.mxu0 0.0
  %515 = vmatpush1.msra.mxu0 0.0
  %516 = vmatprep.subr.mxu0 0.0
  %517 = vmatpush1.msra.mxu0 0.0
  %518 = vmatprep.subr.mxu0 0.0
  %519 = vmatpush1.msra.mxu0 0.0
  %520 = vmatprep.subr.mxu0 0.0
  %521 = vmatpush1.msra.mxu0 0.0
  %522 = vmatprep.subr.mxu0 0.0
  %523 = vmatpush1.msra.mxu0 0.0
  %524 = vmatprep.subr.mxu0 0.0
  %525 = vmatpush1.msra.mxu0 0.0
  %526 = vmatprep.mubr.f32.mxu0 0.0
  %v527 = vand.u32 %v76, 4294901760
  %v528 = vsub.f32 %v76, %v527
  %v529 = vand.u32 %v528, 4294901760
  %530 = vmatmul.mubr.f32.gmra.mrb[0].mxu0 %v529
  %v531 = vpop.f32.mrb[0].mxu0
  %v532 = vadd.f32 %v443, %v531
  %v533 = vpop.f32.mrb[0].mxu0
  %534 = vdwg.mxu0
  %535 = vmatprep.subr.mxu0 0.0
  %v536 = vand.u32 %v77, 4294901760
  %v537 = vsub.f32 %v77, %v536
  %v538 = vand.u32 %v537, 4294901760
  %539 = vmatpush1.msra.mxu0 %v538
  %540 = vmatprep.subr.mxu0 0.0
  %v541 = vand.u32 %v78, 4294901760
  %v542 = vsub.f32 %v78, %v541
  %v543 = vand.u32 %v542, 4294901760
  %544 = vmatpush1.msra.mxu0 %v543
  %545 = vmatprep.subr.mxu0 0.0
  %v546 = vand.u32 %v79, 4294901760
  %v547 = vsub.f32 %v79, %v546
  %v548 = vand.u32 %v547, 4294901760
  %549 = vmatpush1.msra.mxu0 %v548
  %550 = vmatprep.subr.mxu0 0.0
  %v551 = vand.u32 %v80, 4294901760
  %v552 = vsub.f32 %v80, %v551
  %v553 = vand.u32 %v552, 4294901760
  %554 = vmatpush1.msra.mxu0 %v553
  %555 = vmatprep.subr.mxu0 0.0
  %v556 = vand.u32 %v81, 4294901760
  %v557 = vsub.f32 %v81, %v556
  %v558 = vand.u32 %v557, 4294901760
  %559 = vmatpush1.msra.mxu0 %v558
  %560 = vmatprep.subr.mxu0 0.0
  %v561 = vand.u32 %v82, 4294901760
  %v562 = vsub.f32 %v82, %v561
  %v563 = vand.u32 %v562, 4294901760
  %564 = vmatpush1.msra.mxu0 %v563
  %565 = vmatprep.subr.mxu0 0.0
  %v566 = vand.u32 %v83, 4294901760
  %v567 = vsub.f32 %v83, %v566
  %v568 = vand.u32 %v567, 4294901760
  %569 = vmatpush1.msra.mxu0 %v568
  %570 = vmatprep.subr.mxu0 0.0
  %v571 = vand.u32 %v84, 4294901760
  %v572 = vsub.f32 %v84, %v571
  %v573 = vand.u32 %v572, 4294901760
  %574 = vmatpush1.msra.mxu0 %v573
  %575 = vmatprep.subr.mxu0 0.0
  %v576 = vand.u32 %v85, 4294901760
  %v577 = vsub.f32 %v85, %v576
  %v578 = vand.u32 %v577, 4294901760
  %579 = vmatpush1.msra.mxu0 %v578
  %580 = vmatprep.subr.mxu0 0.0
  %v581 = vand.u32 %v86, 4294901760
  %v582 = vsub.f32 %v86, %v581
  %v583 = vand.u32 %v582, 4294901760
  %584 = vmatpush1.msra.mxu0 %v583
  %585 = vmatprep.subr.mxu0 0.0
  %v586 = vand.u32 %v87, 4294901760
  %v587 = vsub.f32 %v87, %v586
  %v588 = vand.u32 %v587, 4294901760
  %589 = vmatpush1.msra.mxu0 %v588
  %590 = vmatprep.subr.mxu0 0.0
  %v591 = vand.u32 %v88, 4294901760
  %v592 = vsub.f32 %v88, %v591
  %v593 = vand.u32 %v592, 4294901760
  %594 = vmatpush1.msra.mxu0 %v593
  %595 = vmatprep.subr.mxu0 0.0
  %v596 = vand.u32 %v89, 4294901760
  %v597 = vsub.f32 %v89, %v596
  %v598 = vand.u32 %v597, 4294901760
  %599 = vmatpush1.msra.mxu0 %v598
  %600 = vmatprep.subr.mxu0 0.0
  %v601 = vand.u32 %v90, 4294901760
  %v602 = vsub.f32 %v90, %v601
  %v603 = vand.u32 %v602, 4294901760
  %604 = vmatpush1.msra.mxu0 %v603
  %605 = vmatprep.subr.mxu0 0.0
  %v606 = vand.u32 %v91, 4294901760
  %v607 = vsub.f32 %v91, %v606
  %v608 = vand.u32 %v607, 4294901760
  %609 = vmatpush1.msra.mxu0 %v608
  %610 = vmatprep.subr.mxu0 0.0
  %v611 = vand.u32 %v92, 4294901760
  %v612 = vsub.f32 %v92, %v611
  %v613 = vand.u32 %v612, 4294901760
  %614 = vmatpush1.msra.mxu0 %v613
  %615 = vmatprep.subr.mxu0 0.0
  %616 = vmatpush1.msra.mxu0 0.0
  %617 = vmatprep.subr.mxu0 0.0
  %618 = vmatpush1.msra.mxu0 0.0
  %619 = vmatprep.subr.mxu0 0.0
  %620 = vmatpush1.msra.mxu0 0.0
  %621 = vmatprep.subr.mxu0 0.0
  %622 = vmatpush1.msra.mxu0 0.0
  %623 = vmatprep.subr.mxu0 0.0
  %624 = vmatpush1.msra.mxu0 0.0
  %625 = vmatprep.subr.mxu0 0.0
  %626 = vmatpush1.msra.mxu0 0.0
  %627 = vmatprep.subr.mxu0 0.0
  %628 = vmatpush1.msra.mxu0 0.0
  %629 = vmatprep.subr.mxu0 0.0
  %630 = vmatpush1.msra.mxu0 0.0
  %631 = vmatprep.subr.mxu0 0.0
  %632 = vmatpush1.msra.mxu0 0.0
  %633 = vmatprep.subr.mxu0 0.0
  %634 = vmatpush1.msra.mxu0 0.0
  %635 = vmatprep.subr.mxu0 0.0
  %636 = vmatpush1.msra.mxu0 0.0
  %637 = vmatprep.subr.mxu0 0.0
  %638 = vmatpush1.msra.mxu0 0.0
  %639 = vmatprep.subr.mxu0 0.0
  %640 = vmatpush1.msra.mxu0 0.0
  %641 = vmatprep.subr.mxu0 0.0
  %642 = vmatpush1.msra.mxu0 0.0
  %643 = vmatprep.subr.mxu0 0.0
  %644 = vmatpush1.msra.mxu0 0.0
  %645 = vmatprep.subr.mxu0 0.0
  %646 = vmatpush1.msra.mxu0 0.0
  %647 = vmatprep.mubr.f32.mxu0 0.0
  %v648 = vand.u32 %v76, 4294901760
  %649 = vmatmul.mubr.f32.gmra.mrb[0].mxu0 %v648
  %v650 = vpop.f32.mrb[0].mxu0
  %v651 = vadd.f32 %v532, %v650
  %v652 = vpop.f32.mrb[0].mxu0
  %653 = vdwg.mxu0
  %654 = vmatprep.subr.mxu0 0.0
  %v655 = vand.u32 %v77, 4294901760
  %656 = vmatpush1.msra.mxu0 %v655
  %657 = vmatprep.subr.mxu0 0.0
  %v658 = vand.u32 %v78, 4294901760
  %659 = vmatpush1.msra.mxu0 %v658
  %660 = vmatprep.subr.mxu0 0.0
  %v661 = vand.u32 %v79, 4294901760
  %662 = vmatpush1.msra.mxu0 %v661
  %663 = vmatprep.subr.mxu0 0.0
  %v664 = vand.u32 %v80, 4294901760
  %665 = vmatpush1.msra.mxu0 %v664
  %666 = vmatprep.subr.mxu0 0.0
  %v667 = vand.u32 %v81, 4294901760
  %668 = vmatpush1.msra.mxu0 %v667
  %669 = vmatprep.subr.mxu0 0.0
  %v670 = vand.u32 %v82, 4294901760
  %671 = vmatpush1.msra.mxu0 %v670
  %672 = vmatprep.subr.mxu0 0.0
  %v673 = vand.u32 %v83, 4294901760
  %674 = vmatpush1.msra.mxu0 %v673
  %675 = vmatprep.subr.mxu0 0.0
  %v676 = vand.u32 %v84, 4294901760
  %677 = vmatpush1.msra.mxu0 %v676
  %678 = vmatprep.subr.mxu0 0.0
  %v679 = vand.u32 %v85, 4294901760
  %680 = vmatpush1.msra.mxu0 %v679
  %681 = vmatprep.subr.mxu0 0.0
  %v682 = vand.u32 %v86, 4294901760
  %683 = vmatpush1.msra.mxu0 %v682
  %684 = vmatprep.subr.mxu0 0.0
  %v685 = vand.u32 %v87, 4294901760
  %686 = vmatpush1.msra.mxu0 %v685
  %687 = vmatprep.subr.mxu0 0.0
  %v688 = vand.u32 %v88, 4294901760
  %689 = vmatpush1.msra.mxu0 %v688
  %690 = vmatprep.subr.mxu0 0.0
  %v691 = vand.u32 %v89, 4294901760
  %692 = vmatpush1.msra.mxu0 %v691
  %693 = vmatprep.subr.mxu0 0.0
  %v694 = vand.u32 %v90, 4294901760
  %695 = vmatpush1.msra.mxu0 %v694
  %696 = vmatprep.subr.mxu0 0.0
  %v697 = vand.u32 %v91, 4294901760
  %698 = vmatpush1.msra.mxu0 %v697
  %699 = vmatprep.subr.mxu0 0.0
  %v700 = vand.u32 %v92, 4294901760
  %701 = vmatpush1.msra.mxu0 %v700
  %702 = vmatprep.subr.mxu0 0.0
  %703 = vmatpush1.msra.mxu0 0.0
  %704 = vmatprep.subr.mxu0 0.0
  %705 = vmatpush1.msra.mxu0 0.0
  %706 = vmatprep.subr.mxu0 0.0
  %707 = vmatpush1.msra.mxu0 0.0
  %708 = vmatprep.subr.mxu0 0.0
  %709 = vmatpush1.msra.mxu0 0.0
  %710 = vmatprep.subr.mxu0 0.0
  %711 = vmatpush1.msra.mxu0 0.0
  %712 = vmatprep.subr.mxu0 0.0
  %713 = vmatpush1.msra.mxu0 0.0
  %714 = vmatprep.subr.mxu0 0.0
  %715 = vmatpush1.msra.mxu0 0.0
  %716 = vmatprep.subr.mxu0 0.0
  %717 = vmatpush1.msra.mxu0 0.0
  %718 = vmatprep.subr.mxu0 0.0
  %719 = vmatpush1.msra.mxu0 0.0
  %720 = vmatprep.subr.mxu0 0.0
  %721 = vmatpush1.msra.mxu0 0.0
  %722 = vmatprep.subr.mxu0 0.0
  %723 = vmatpush1.msra.mxu0 0.0
  %724 = vmatprep.subr.mxu0 0.0
  %725 = vmatpush1.msra.mxu0 0.0
  %726 = vmatprep.subr.mxu0 0.0
  %727 = vmatpush1.msra.mxu0 0.0
  %728 = vmatprep.subr.mxu0 0.0
  %729 = vmatpush1.msra.mxu0 0.0
  %730 = vmatprep.subr.mxu0 0.0
  %731 = vmatpush1.msra.mxu0 0.0
  %732 = vmatprep.subr.mxu0 0.0
  %733 = vmatpush1.msra.mxu0 0.0
  %734 = vmatprep.mubr.f32.mxu0 0.0
  %v735 = vand.u32 %v76, 4294901760
  %736 = vmatmul.mubr.f32.gmra.mrb[0].mxu0 %v735
  %v737 = vpop.f32.mrb[0].mxu0
  %v738 = vadd.f32 %v651, %v737
  %v739 = vpop.f32.mrb[0].mxu0
  %740 = vdwg.mxu0
  %v741 = vmax.f32 %v738, 0.0
  %v742 = vld [vmem:[%s5] sm:$0xff]
  %v743 = vld [vmem:[%s5 + $0x8] sm:$0xff]
  %v744 = vld [vmem:[%s5 + $0x10] sm:$0xff]
  %v745 = vld [vmem:[%s5 + $0x18] sm:$0xff]
  %v746 = vld [vmem:[%s5 + $0x20] sm:$0xff]
  %v747 = vld [vmem:[%s5 + $0x28] sm:$0xff]
  %v748 = vld [vmem:[%s5 + $0x30] sm:$0xff]
  %v749 = vld [vmem:[%s5 + $0x38] sm:$0xff]
  %v750 = vld [vmem:[%s5 + $0x40] sm:$0xff]
  %v751 = vld [vmem:[%s5 + $0x48] sm:$0xff]
  %v752 = vld [vmem:[%s5 + $0x50] sm:$0xff]
  %v753 = vld [vmem:[%s5 + $0x58] sm:$0xff]
  %v754 = vld [vmem:[%s5 + $0x60] sm:$0xff]
  %v755 = vld [vmem:[%s5 + $0x68] sm:$0xff]
  %v756 = vld [vmem:[%s5 + $0x70] sm:$0xff]
  %v757 = vld [vmem:[%s5 + $0x78] sm:$0xff]
  %v758 = vld [vmem:[%s6] sm:$0x1]
  %v760 = vlaneseq
  %v761 = vshrl.u32 %v760, 7
  %v762 = vsub.s32 0, %v761
  %v763 = vrot.slane %v758, %v762
  %765 = vmatprep.subr.mxu0 0.0
  %v766 = vand.u32 %v742, 4294901760
  %767 = vmatpush1.msra.mxu0 %v766
  %768 = vmatprep.subr.mxu0 0.0
  %v769 = vand.u32 %v743, 4294901760
  %770 = vmatpush1.msra.mxu0 %v769
  %771 = vmatprep.subr.mxu0 0.0
  %v772 = vand.u32 %v744, 4294901760
  %773 = vmatpush1.msra.mxu0 %v772
  %774 = vmatprep.subr.mxu0 0.0
  %v775 = vand.u32 %v745, 4294901760
  %776 = vmatpush1.msra.mxu0 %v775
  %777 = vmatprep.subr.mxu0 0.0
  %v778 = vand.u32 %v746, 4294901760
  %779 = vmatpush1.msra.mxu0 %v778
  %780 = vmatprep.subr.mxu0 0.0
  %v781 = vand.u32 %v747, 4294901760
  %782 = vmatpush1.msra.mxu0 %v781
  %783 = vmatprep.subr.mxu0 0.0
  %v784 = vand.u32 %v748, 4294901760
  %785 = vmatpush1.msra.mxu0 %v784
  %786 = vmatprep.subr.mxu0 0.0
  %v787 = vand.u32 %v749, 4294901760
  %788 = vmatpush1.msra.mxu0 %v787
  %789 = vmatprep.subr.mxu0 0.0
  %v790 = vand.u32 %v750, 4294901760
  %791 = vmatpush1.msra.mxu0 %v790
  %792 = vmatprep.subr.mxu0 0.0
  %v793 = vand.u32 %v751, 4294901760
  %794 = vmatpush1.msra.mxu0 %v793
  %795 = vmatprep.subr.mxu0 0.0
  %v796 = vand.u32 %v752, 4294901760
  %797 = vmatpush1.msra.mxu0 %v796
  %798 = vmatprep.subr.mxu0 0.0
  %v799 = vand.u32 %v753, 4294901760
  %800 = vmatpush1.msra.mxu0 %v799
  %801 = vmatprep.subr.mxu0 0.0
  %v802 = vand.u32 %v754, 4294901760
  %803 = vmatpush1.msra.mxu0 %v802
  %804 = vmatprep.subr.mxu0 0.0
  %v805 = vand.u32 %v755, 4294901760
  %806 = vmatpush1.msra.mxu0 %v805
  %807 = vmatprep.subr.mxu0 0.0
  %v808 = vand.u32 %v756, 4294901760
  %809 = vmatpush1.msra.mxu0 %v808
  %810 = vmatprep.subr.mxu0 0.0
  %v811 = vand.u32 %v757, 4294901760
  %812 = vmatpush1.msra.mxu0 %v811
  %813 = vmatprep.subr.mxu0 0.0
  %814 = vmatpush1.msra.mxu0 0.0
  %815 = vmatprep.subr.mxu0 0.0
  %816 = vmatpush1.msra.mxu0 0.0
  %817 = vmatprep.subr.mxu0 0.0
  %818 = vmatpush1.msra.mxu0 0.0
  %819 = vmatprep.subr.mxu0 0.0
  %820 = vmatpush1.msra.mxu0 0.0
  %821 = vmatprep.subr.mxu0 0.0
  %822 = vmatpush1.msra.mxu0 0.0
  %823 = vmatprep.subr.mxu0 0.0
  %824 = vmatpush1.msra.mxu0 0.0
  %825 = vmatprep.subr.mxu0 0.0
  %826 = vmatpush1.msra.mxu0 0.0
  %827 = vmatprep.subr.mxu0 0.0
  %828 = vmatpush1.msra.mxu0 0.0
  %829 = vmatprep.subr.mxu0 0.0
  %830 = vmatpush1.msra.mxu0 0.0
  %831 = vmatprep.subr.mxu0 0.0
  %832 = vmatpush1.msra.mxu0 0.0
  %833 = vmatprep.subr.mxu0 0.0
  %834 = vmatpush1.msra.mxu0 0.0
  %835 = vmatprep.subr.mxu0 0.0
  %836 = vmatpush1.msra.mxu0 0.0
  %837 = vmatprep.subr.mxu0 0.0
  %838 = vmatpush1.msra.mxu0 0.0
  %839 = vmatprep.subr.mxu0 0.0
  %840 = vmatpush1.msra.mxu0 0.0
  %841 = vmatprep.subr.mxu0 0.0
  %842 = vmatpush1.msra.mxu0 0.0
  %843 = vmatprep.subr.mxu0 0.0
  %844 = vmatpush1.msra.mxu0 0.0
  %845 = vmatprep.mubr.f32.mxu0 0.0
  %v846 = vand.u32 %v741, 4294901760
  %v847 = vsub.f32 %v741, %v846
  %v848 = vand.u32 %v847, 4294901760
  %v849 = vsub.f32 %v847, %v848
  %v850 = vand.u32 %v849, 4294901760
  %851 = vmatmul.mubr.f32.gmra.mrb[0].mxu0 %v850
  %v852 = vpop.f32.mrb[0].mxu0
  %v853 = vadd.f32 %v763, %v852
  %v854 = vpop.f32.mrb[0].mxu0
  %855 = vdwg.mxu0
  %856 = vmatprep.subr.mxu0 0.0
  %v857 = vand.u32 %v742, 4294901760
  %v858 = vsub.f32 %v742, %v857
  %v859 = vand.u32 %v858, 4294901760
  %v860 = vsub.f32 %v858, %v859
  %v861 = vand.u32 %v860, 4294901760
  %862 = vmatpush1.msra.mxu0 %v861
  %863 = vmatprep.subr.mxu0 0.0
  %v864 = vand.u32 %v743, 4294901760
  %v865 = vsub.f32 %v743, %v864
  %v866 = vand.u32 %v865, 4294901760
  %v867 = vsub.f32 %v865, %v866
  %v868 = vand.u32 %v867, 4294901760
  %869 = vmatpush1.msra.mxu0 %v868
  %870 = vmatprep.subr.mxu0 0.0
  %v871 = vand.u32 %v744, 4294901760
  %v872 = vsub.f32 %v744, %v871
  %v873 = vand.u32 %v872, 4294901760
  %v874 = vsub.f32 %v872, %v873
  %v875 = vand.u32 %v874, 4294901760
  %876 = vmatpush1.msra.mxu0 %v875
  %877 = vmatprep.subr.mxu0 0.0
  %v878 = vand.u32 %v745, 4294901760
  %v879 = vsub.f32 %v745, %v878
  %v880 = vand.u32 %v879, 4294901760
  %v881 = vsub.f32 %v879, %v880
  %v882 = vand.u32 %v881, 4294901760
  %883 = vmatpush1.msra.mxu0 %v882
  %884 = vmatprep.subr.mxu0 0.0
  %v885 = vand.u32 %v746, 4294901760
  %v886 = vsub.f32 %v746, %v885
  %v887 = vand.u32 %v886, 4294901760
  %v888 = vsub.f32 %v886, %v887
  %v889 = vand.u32 %v888, 4294901760
  %890 = vmatpush1.msra.mxu0 %v889
  %891 = vmatprep.subr.mxu0 0.0
  %v892 = vand.u32 %v747, 4294901760
  %v893 = vsub.f32 %v747, %v892
  %v894 = vand.u32 %v893, 4294901760
  %v895 = vsub.f32 %v893, %v894
  %v896 = vand.u32 %v895, 4294901760
  %897 = vmatpush1.msra.mxu0 %v896
  %898 = vmatprep.subr.mxu0 0.0
  %v899 = vand.u32 %v748, 4294901760
  %v900 = vsub.f32 %v748, %v899
  %v901 = vand.u32 %v900, 4294901760
  %v902 = vsub.f32 %v900, %v901
  %v903 = vand.u32 %v902, 4294901760
  %904 = vmatpush1.msra.mxu0 %v903
  %905 = vmatprep.subr.mxu0 0.0
  %v906 = vand.u32 %v749, 4294901760
  %v907 = vsub.f32 %v749, %v906
  %v908 = vand.u32 %v907, 4294901760
  %v909 = vsub.f32 %v907, %v908
  %v910 = vand.u32 %v909, 4294901760
  %911 = vmatpush1.msra.mxu0 %v910
  %912 = vmatprep.subr.mxu0 0.0
  %v913 = vand.u32 %v750, 4294901760
  %v914 = vsub.f32 %v750, %v913
  %v915 = vand.u32 %v914, 4294901760
  %v916 = vsub.f32 %v914, %v915
  %v917 = vand.u32 %v916, 4294901760
  %918 = vmatpush1.msra.mxu0 %v917
  %919 = vmatprep.subr.mxu0 0.0
  %v920 = vand.u32 %v751, 4294901760
  %v921 = vsub.f32 %v751, %v920
  %v922 = vand.u32 %v921, 4294901760
  %v923 = vsub.f32 %v921, %v922
  %v924 = vand.u32 %v923, 4294901760
  %925 = vmatpush1.msra.mxu0 %v924
  %926 = vmatprep.subr.mxu0 0.0
  %v927 = vand.u32 %v752, 4294901760
  %v928 = vsub.f32 %v752, %v927
  %v929 = vand.u32 %v928, 4294901760
  %v930 = vsub.f32 %v928, %v929
  %v931 = vand.u32 %v930, 4294901760
  %932 = vmatpush1.msra.mxu0 %v931
  %933 = vmatprep.subr.mxu0 0.0
  %v934 = vand.u32 %v753, 4294901760
  %v935 = vsub.f32 %v753, %v934
  %v936 = vand.u32 %v935, 4294901760
  %v937 = vsub.f32 %v935, %v936
  %v938 = vand.u32 %v937, 4294901760
  %939 = vmatpush1.msra.mxu0 %v938
  %940 = vmatprep.subr.mxu0 0.0
  %v941 = vand.u32 %v754, 4294901760
  %v942 = vsub.f32 %v754, %v941
  %v943 = vand.u32 %v942, 4294901760
  %v944 = vsub.f32 %v942, %v943
  %v945 = vand.u32 %v944, 4294901760
  %946 = vmatpush1.msra.mxu0 %v945
  %947 = vmatprep.subr.mxu0 0.0
  %v948 = vand.u32 %v755, 4294901760
  %v949 = vsub.f32 %v755, %v948
  %v950 = vand.u32 %v949, 4294901760
  %v951 = vsub.f32 %v949, %v950
  %v952 = vand.u32 %v951, 4294901760
  %953 = vmatpush1.msra.mxu0 %v952
  %954 = vmatprep.subr.mxu0 0.0
  %v955 = vand.u32 %v756, 4294901760
  %v956 = vsub.f32 %v756, %v955
  %v957 = vand.u32 %v956, 4294901760
  %v958 = vsub.f32 %v956, %v957
  %v959 = vand.u32 %v958, 4294901760
  %960 = vmatpush1.msra.mxu0 %v959
  %961 = vmatprep.subr.mxu0 0.0
  %v962 = vand.u32 %v757, 4294901760
  %v963 = vsub.f32 %v757, %v962
  %v964 = vand.u32 %v963, 4294901760
  %v965 = vsub.f32 %v963, %v964
  %v966 = vand.u32 %v965, 4294901760
  %967 = vmatpush1.msra.mxu0 %v966
  %968 = vmatprep.subr.mxu0 0.0
  %969 = vmatpush1.msra.mxu0 0.0
  %970 = vmatprep.subr.mxu0 0.0
  %971 = vmatpush1.msra.mxu0 0.0
  %972 = vmatprep.subr.mxu0 0.0
  %973 = vmatpush1.msra.mxu0 0.0
  %974 = vmatprep.subr.mxu0 0.0
  %975 = vmatpush1.msra.mxu0 0.0
  %976 = vmatprep.subr.mxu0 0.0
  %977 = vmatpush1.msra.mxu0 0.0
  %978 = vmatprep.subr.mxu0 0.0
  %979 = vmatpush1.msra.mxu0 0.0
  %980 = vmatprep.subr.mxu0 0.0
  %981 = vmatpush1.msra.mxu0 0.0
  %982 = vmatprep.subr.mxu0 0.0
  %983 = vmatpush1.msra.mxu0 0.0
  %984 = vmatprep.subr.mxu0 0.0
  %985 = vmatpush1.msra.mxu0 0.0
  %986 = vmatprep.subr.mxu0 0.0
  %987 = vmatpush1.msra.mxu0 0.0
  %988 = vmatprep.subr.mxu0 0.0
  %989 = vmatpush1.msra.mxu0 0.0
  %990 = vmatprep.subr.mxu0 0.0
  %991 = vmatpush1.msra.mxu0 0.0
  %992 = vmatprep.subr.mxu0 0.0
  %993 = vmatpush1.msra.mxu0 0.0
  %994 = vmatprep.subr.mxu0 0.0
  %995 = vmatpush1.msra.mxu0 0.0
  %996 = vmatprep.subr.mxu0 0.0
  %997 = vmatpush1.msra.mxu0 0.0
  %998 = vmatprep.subr.mxu0 0.0
  %999 = vmatpush1.msra.mxu0 0.0
  %1000 = vmatprep.mubr.f32.mxu0 0.0
  %v1001 = vand.u32 %v741, 4294901760
  %1002 = vmatmul.mubr.f32.gmra.mrb[0].mxu0 %v1001
  %v1003 = vpop.f32.mrb[0].mxu0
  %v1004 = vadd.f32 %v853, %v1003
  %v1005 = vpop.f32.mrb[0].mxu0
  %1006 = vdwg.mxu0
  %1007 = vmatprep.subr.mxu0 0.0
  %v1008 = vand.u32 %v742, 4294901760
  %v1009 = vsub.f32 %v742, %v1008
  %1010 = vmatpush1.msra.mxu0 %v1009
  %1011 = vmatprep.subr.mxu0 0.0
  %v1012 = vand.u32 %v743, 4294901760
  %v1013 = vsub.f32 %v743, %v1012
  %1014 = vmatpush1.msra.mxu0 %v1013
  %1015 = vmatprep.subr.mxu0 0.0
  %v1016 = vand.u32 %v744, 4294901760
  %v1017 = vsub.f32 %v744, %v1016
  %1018 = vmatpush1.msra.mxu0 %v1017
  %1019 = vmatprep.subr.mxu0 0.0
  %v1020 = vand.u32 %v745, 4294901760
  %v1021 = vsub.f32 %v745, %v1020
  %1022 = vmatpush1.msra.mxu0 %v1021
  %1023 = vmatprep.subr.mxu0 0.0
  %v1024 = vand.u32 %v746, 4294901760
  %v1025 = vsub.f32 %v746, %v1024
  %1026 = vmatpush1.msra.mxu0 %v1025
  %1027 = vmatprep.subr.mxu0 0.0
  %v1028 = vand.u32 %v747, 4294901760
  %v1029 = vsub.f32 %v747, %v1028
  %1030 = vmatpush1.msra.mxu0 %v1029
  %1031 = vmatprep.subr.mxu0 0.0
  %v1032 = vand.u32 %v748, 4294901760
  %v1033 = vsub.f32 %v748, %v1032
  %1034 = vmatpush1.msra.mxu0 %v1033
  %1035 = vmatprep.subr.mxu0 0.0
  %v1036 = vand.u32 %v749, 4294901760
  %v1037 = vsub.f32 %v749, %v1036
  %1038 = vmatpush1.msra.mxu0 %v1037
  %1039 = vmatprep.subr.mxu0 0.0
  %v1040 = vand.u32 %v750, 4294901760
  %v1041 = vsub.f32 %v750, %v1040
  %1042 = vmatpush1.msra.mxu0 %v1041
  %1043 = vmatprep.subr.mxu0 0.0
  %v1044 = vand.u32 %v751, 4294901760
  %v1045 = vsub.f32 %v751, %v1044
  %1046 = vmatpush1.msra.mxu0 %v1045
  %1047 = vmatprep.subr.mxu0 0.0
  %v1048 = vand.u32 %v752, 4294901760
  %v1049 = vsub.f32 %v752, %v1048
  %1050 = vmatpush1.msra.mxu0 %v1049
  %1051 = vmatprep.subr.mxu0 0.0
  %v1052 = vand.u32 %v753, 4294901760
  %v1053 = vsub.f32 %v753, %v1052
  %1054 = vmatpush1.msra.mxu0 %v1053
  %1055 = vmatprep.subr.mxu0 0.0
  %v1056 = vand.u32 %v754, 4294901760
  %v1057 = vsub.f32 %v754, %v1056
  %1058 = vmatpush1.msra.mxu0 %v1057
  %1059 = vmatprep.subr.mxu0 0.0
  %v1060 = vand.u32 %v755, 4294901760
  %v1061 = vsub.f32 %v755, %v1060
  %1062 = vmatpush1.msra.mxu0 %v1061
  %1063 = vmatprep.subr.mxu0 0.0
  %v1064 = vand.u32 %v756, 4294901760
  %v1065 = vsub.f32 %v756, %v1064
  %1066 = vmatpush1.msra.mxu0 %v1065
  %1067 = vmatprep.subr.mxu0 0.0
  %v1068 = vand.u32 %v757, 4294901760
  %v1069 = vsub.f32 %v757, %v1068
  %1070 = vmatpush1.msra.mxu0 %v1069
  %1071 = vmatprep.subr.mxu0 0.0
  %1072 = vmatpush1.msra.mxu0 0.0
  %1073 = vmatprep.subr.mxu0 0.0
  %1074 = vmatpush1.msra.mxu0 0.0
  %1075 = vmatprep.subr.mxu0 0.0
  %1076 = vmatpush1.msra.mxu0 0.0
  %1077 = vmatprep.subr.mxu0 0.0
  %1078 = vmatpush1.msra.mxu0 0.0
  %1079 = vmatprep.subr.mxu0 0.0
  %1080 = vmatpush1.msra.mxu0 0.0
  %1081 = vmatprep.subr.mxu0 0.0
  %1082 = vmatpush1.msra.mxu0 0.0
  %1083 = vmatprep.subr.mxu0 0.0
  %1084 = vmatpush1.msra.mxu0 0.0
  %1085 = vmatprep.subr.mxu0 0.0
  %1086 = vmatpush1.msra.mxu0 0.0
  %1087 = vmatprep.subr.mxu0 0.0
  %1088 = vmatpush1.msra.mxu0 0.0
  %1089 = vmatprep.subr.mxu0 0.0
  %1090 = vmatpush1.msra.mxu0 0.0
  %1091 = vmatprep.subr.mxu0 0.0
  %1092 = vmatpush1.msra.mxu0 0.0
  %1093 = vmatprep.subr.mxu0 0.0
  %1094 = vmatpush1.msra.mxu0 0.0
  %1095 = vmatprep.subr.mxu0 0.0
  %1096 = vmatpush1.msra.mxu0 0.0
  %1097 = vmatprep.subr.mxu0 0.0
  %1098 = vmatpush1.msra.mxu0 0.0
  %1099 = vmatprep.subr.mxu0 0.0
  %1100 = vmatpush1.msra.mxu0 0.0
  %1101 = vmatprep.subr.mxu0 0.0
  %1102 = vmatpush1.msra.mxu0 0.0
  %1103 = vmatprep.mubr.f32.mxu0 0.0
  %v1104 = vand.u32 %v741, 4294901760
  %v1105 = vsub.f32 %v741, %v1104
  %1106 = vmatmul.mubr.f32.gmra.mrb[0].mxu0 %v1105
  %v1107 = vpop.f32.mrb[0].mxu0
  %v1108 = vadd.f32 %v1004, %v1107
  %v1109 = vpop.f32.mrb[0].mxu0
  %1110 = vdwg.mxu0
  %1111 = vmatprep.subr.mxu0 0.0
  %v1112 = vand.u32 %v742, 4294901760
  %1113 = vmatpush1.msra.mxu0 %v1112
  %1114 = vmatprep.subr.mxu0 0.0
  %v1115 = vand.u32 %v743, 4294901760
  %1116 = vmatpush1.msra.mxu0 %v1115
  %1117 = vmatprep.subr.mxu0 0.0
  %v1118 = vand.u32 %v744, 4294901760
  %1119 = vmatpush1.msra.mxu0 %v1118
  %1120 = vmatprep.subr.mxu0 0.0
  %v1121 = vand.u32 %v745, 4294901760
  %1122 = vmatpush1.msra.mxu0 %v1121
  %1123 = vmatprep.subr.mxu0 0.0
  %v1124 = vand.u32 %v746, 4294901760
  %1125 = vmatpush1.msra.mxu0 %v1124
  %1126 = vmatprep.subr.mxu0 0.0
  %v1127 = vand.u32 %v747, 4294901760
  %1128 = vmatpush1.msra.mxu0 %v1127
  %1129 = vmatprep.subr.mxu0 0.0
  %v1130 = vand.u32 %v748, 4294901760
  %1131 = vmatpush1.msra.mxu0 %v1130
  %1132 = vmatprep.subr.mxu0 0.0
  %v1133 = vand.u32 %v749, 4294901760
  %1134 = vmatpush1.msra.mxu0 %v1133
  %1135 = vmatprep.subr.mxu0 0.0
  %v1136 = vand.u32 %v750, 4294901760
  %1137 = vmatpush1.msra.mxu0 %v1136
  %1138 = vmatprep.subr.mxu0 0.0
  %v1139 = vand.u32 %v751, 4294901760
  %1140 = vmatpush1.msra.mxu0 %v1139
  %1141 = vmatprep.subr.mxu0 0.0
  %v1142 = vand.u32 %v752, 4294901760
  %1143 = vmatpush1.msra.mxu0 %v1142
  %1144 = vmatprep.subr.mxu0 0.0
  %v1145 = vand.u32 %v753, 4294901760
  %1146 = vmatpush1.msra.mxu0 %v1145
  %1147 = vmatprep.subr.mxu0 0.0
  %v1148 = vand.u32 %v754, 4294901760
  %1149 = vmatpush1.msra.mxu0 %v1148
  %1150 = vmatprep.subr.mxu0 0.0
  %v1151 = vand.u32 %v755, 4294901760
  %1152 = vmatpush1.msra.mxu0 %v1151
  %1153 = vmatprep.subr.mxu0 0.0
  %v1154 = vand.u32 %v756, 4294901760
  %1155 = vmatpush1.msra.mxu0 %v1154
  %1156 = vmatprep.subr.mxu0 0.0
  %v1157 = vand.u32 %v757, 4294901760
  %1158 = vmatpush1.msra.mxu0 %v1157
  %1159 = vmatprep.subr.mxu0 0.0
  %1160 = vmatpush1.msra.mxu0 0.0
  %1161 = vmatprep.subr.mxu0 0.0
  %1162 = vmatpush1.msra.mxu0 0.0
  %1163 = vmatprep.subr.mxu0 0.0
  %1164 = vmatpush1.msra.mxu0 0.0
  %1165 = vmatprep.subr.mxu0 0.0
  %1166 = vmatpush1.msra.mxu0 0.0
  %1167 = vmatprep.subr.mxu0 0.0
  %1168 = vmatpush1.msra.mxu0 0.0
  %1169 = vmatprep.subr.mxu0 0.0
  %1170 = vmatpush1.msra.mxu0 0.0
  %1171 = vmatprep.subr.mxu0 0.0
  %1172 = vmatpush1.msra.mxu0 0.0
  %1173 = vmatprep.subr.mxu0 0.0
  %1174 = vmatpush1.msra.mxu0 0.0
  %1175 = vmatprep.subr.mxu0 0.0
  %1176 = vmatpush1.msra.mxu0 0.0
  %1177 = vmatprep.subr.mxu0 0.0
  %1178 = vmatpush1.msra.mxu0 0.0
  %1179 = vmatprep.subr.mxu0 0.0
  %1180 = vmatpush1.msra.mxu0 0.0
  %1181 = vmatprep.subr.mxu0 0.0
  %1182 = vmatpush1.msra.mxu0 0.0
  %1183 = vmatprep.subr.mxu0 0.0
  %1184 = vmatpush1.msra.mxu0 0.0
  %1185 = vmatprep.subr.mxu0 0.0
  %1186 = vmatpush1.msra.mxu0 0.0
  %1187 = vmatprep.subr.mxu0 0.0
  %1188 = vmatpush1.msra.mxu0 0.0
  %1189 = vmatprep.subr.mxu0 0.0
  %1190 = vmatpush1.msra.mxu0 0.0
  %1191 = vmatprep.mubr.f32.mxu0 0.0
  %v1192 = vand.u32 %v741, 4294901760
  %v1193 = vsub.f32 %v741, %v1192
  %v1194 = vand.u32 %v1193, 4294901760
  %1195 = vmatmul.mubr.f32.gmra.mrb[0].mxu0 %v1194
  %v1196 = vpop.f32.mrb[0].mxu0
  %v1197 = vadd.f32 %v1108, %v1196
  %v1198 = vpop.f32.mrb[0].mxu0
  %1199 = vdwg.mxu0
  %1200 = vmatprep.subr.mxu0 0.0
  %v1201 = vand.u32 %v742, 4294901760
  %v1202 = vsub.f32 %v742, %v1201
  %v1203 = vand.u32 %v1202, 4294901760
  %1204 = vmatpush1.msra.mxu0 %v1203
  %1205 = vmatprep.subr.mxu0 0.0
  %v1206 = vand.u32 %v743, 4294901760
  %v1207 = vsub.f32 %v743, %v1206
  %v1208 = vand.u32 %v1207, 4294901760
  %1209 = vmatpush1.msra.mxu0 %v1208
  %1210 = vmatprep.subr.mxu0 0.0
  %v1211 = vand.u32 %v744, 4294901760
  %v1212 = vsub.f32 %v744, %v1211
  %v1213 = vand.u32 %v1212, 4294901760
  %1214 = vmatpush1.msra.mxu0 %v1213
  %1215 = vmatprep.subr.mxu0 0.0
  %v1216 = vand.u32 %v745, 4294901760
  %v1217 = vsub.f32 %v745, %v1216
  %v1218 = vand.u32 %v1217, 4294901760
  %1219 = vmatpush1.msra.mxu0 %v1218
  %1220 = vmatprep.subr.mxu0 0.0
  %v1221 = vand.u32 %v746, 4294901760
  %v1222 = vsub.f32 %v746, %v1221
  %v1223 = vand.u32 %v1222, 4294901760
  %1224 = vmatpush1.msra.mxu0 %v1223
  %1225 = vmatprep.subr.mxu0 0.0
  %v1226 = vand.u32 %v747, 4294901760
  %v1227 = vsub.f32 %v747, %v1226
  %v1228 = vand.u32 %v1227, 4294901760
  %1229 = vmatpush1.msra.mxu0 %v1228
  %1230 = vmatprep.subr.mxu0 0.0
  %v1231 = vand.u32 %v748, 4294901760
  %v1232 = vsub.f32 %v748, %v1231
  %v1233 = vand.u32 %v1232, 4294901760
  %1234 = vmatpush1.msra.mxu0 %v1233
  %1235 = vmatprep.subr.mxu0 0.0
  %v1236 = vand.u32 %v749, 4294901760
  %v1237 = vsub.f32 %v749, %v1236
  %v1238 = vand.u32 %v1237, 4294901760
  %1239 = vmatpush1.msra.mxu0 %v1238
  %1240 = vmatprep.subr.mxu0 0.0
  %v1241 = vand.u32 %v750, 4294901760
  %v1242 = vsub.f32 %v750, %v1241
  %v1243 = vand.u32 %v1242, 4294901760
  %1244 = vmatpush1.msra.mxu0 %v1243
  %1245 = vmatprep.subr.mxu0 0.0
  %v1246 = vand.u32 %v751, 4294901760
  %v1247 = vsub.f32 %v751, %v1246
  %v1248 = vand.u32 %v1247, 4294901760
  %1249 = vmatpush1.msra.mxu0 %v1248
  %1250 = vmatprep.subr.mxu0 0.0
  %v1251 = vand.u32 %v752, 4294901760
  %v1252 = vsub.f32 %v752, %v1251
  %v1253 = vand.u32 %v1252, 4294901760
  %1254 = vmatpush1.msra.mxu0 %v1253
  %1255 = vmatprep.subr.mxu0 0.0
  %v1256 = vand.u32 %v753, 4294901760
  %v1257 = vsub.f32 %v753, %v1256
  %v1258 = vand.u32 %v1257, 4294901760
  %1259 = vmatpush1.msra.mxu0 %v1258
  %1260 = vmatprep.subr.mxu0 0.0
  %v1261 = vand.u32 %v754, 4294901760
  %v1262 = vsub.f32 %v754, %v1261
  %v1263 = vand.u32 %v1262, 4294901760
  %1264 = vmatpush1.msra.mxu0 %v1263
  %1265 = vmatprep.subr.mxu0 0.0
  %v1266 = vand.u32 %v755, 4294901760
  %v1267 = vsub.f32 %v755, %v1266
  %v1268 = vand.u32 %v1267, 4294901760
  %1269 = vmatpush1.msra.mxu0 %v1268
  %1270 = vmatprep.subr.mxu0 0.0
  %v1271 = vand.u32 %v756, 4294901760
  %v1272 = vsub.f32 %v756, %v1271
  %v1273 = vand.u32 %v1272, 4294901760
  %1274 = vmatpush1.msra.mxu0 %v1273
  %1275 = vmatprep.subr.mxu0 0.0
  %v1276 = vand.u32 %v757, 4294901760
  %v1277 = vsub.f32 %v757, %v1276
  %v1278 = vand.u32 %v1277, 4294901760
  %1279 = vmatpush1.msra.mxu0 %v1278
  %1280 = vmatprep.subr.mxu0 0.0
  %1281 = vmatpush1.msra.mxu0 0.0
  %1282 = vmatprep.subr.mxu0 0.0
  %1283 = vmatpush1.msra.mxu0 0.0
  %1284 = vmatprep.subr.mxu0 0.0
  %1285 = vmatpush1.msra.mxu0 0.0
  %1286 = vmatprep.subr.mxu0 0.0
  %1287 = vmatpush1.msra.mxu0 0.0
  %1288 = vmatprep.subr.mxu0 0.0
  %1289 = vmatpush1.msra.mxu0 0.0
  %1290 = vmatprep.subr.mxu0 0.0
  %1291 = vmatpush1.msra.mxu0 0.0
  %1292 = vmatprep.subr.mxu0 0.0
  %1293 = vmatpush1.msra.mxu0 0.0
  %1294 = vmatprep.subr.mxu0 0.0
  %1295 = vmatpush1.msra.mxu0 0.0
  %1296 = vmatprep.subr.mxu0 0.0
  %1297 = vmatpush1.msra.mxu0 0.0
  %1298 = vmatprep.subr.mxu0 0.0
  %1299 = vmatpush1.msra.mxu0 0.0
  %1300 = vmatprep.subr.mxu0 0.0
  %1301 = vmatpush1.msra.mxu0 0.0
  %1302 = vmatprep.subr.mxu0 0.0
  %1303 = vmatpush1.msra.mxu0 0.0
  %1304 = vmatprep.subr.mxu0 0.0
  %1305 = vmatpush1.msra.mxu0 0.0
  %1306 = vmatprep.subr.mxu0 0.0
  %1307 = vmatpush1.msra.mxu0 0.0
  %1308 = vmatprep.subr.mxu0 0.0
  %1309 = vmatpush1.msra.mxu0 0.0
  %1310 = vmatprep.subr.mxu0 0.0
  %1311 = vmatpush1.msra.mxu0 0.0
  %1312 = vmatprep.mubr.f32.mxu0 0.0
  %v1313 = vand.u32 %v741, 4294901760
  %1314 = vmatmul.mubr.f32.gmra.mrb[0].mxu0 %v1313
  %v1315 = vpop.f32.mrb[0].mxu0
  %v1316 = vadd.f32 %v1197, %v1315
  %v1317 = vpop.f32.mrb[0].mxu0
  %1318 = vdwg.mxu0
  %1319 = vmatprep.subr.mxu0 0.0
  %v1320 = vand.u32 %v742, 4294901760
  %1321 = vmatpush1.msra.mxu0 %v1320
  %1322 = vmatprep.subr.mxu0 0.0
  %v1323 = vand.u32 %v743, 4294901760
  %1324 = vmatpush1.msra.mxu0 %v1323
  %1325 = vmatprep.subr.mxu0 0.0
  %v1326 = vand.u32 %v744, 4294901760
  %1327 = vmatpush1.msra.mxu0 %v1326
  %1328 = vmatprep.subr.mxu0 0.0
  %v1329 = vand.u32 %v745, 4294901760
  %1330 = vmatpush1.msra.mxu0 %v1329
  %1331 = vmatprep.subr.mxu0 0.0
  %v1332 = vand.u32 %v746, 4294901760
  %1333 = vmatpush1.msra.mxu0 %v1332
  %1334 = vmatprep.subr.mxu0 0.0
  %v1335 = vand.u32 %v747, 4294901760
  %1336 = vmatpush1.msra.mxu0 %v1335
  %1337 = vmatprep.subr.mxu0 0.0
  %v1338 = vand.u32 %v748, 4294901760
  %1339 = vmatpush1.msra.mxu0 %v1338
  %1340 = vmatprep.subr.mxu0 0.0
  %v1341 = vand.u32 %v749, 4294901760
  %1342 = vmatpush1.msra.mxu0 %v1341
  %1343 = vmatprep.subr.mxu0 0.0
  %v1344 = vand.u32 %v750, 4294901760
  %1345 = vmatpush1.msra.mxu0 %v1344
  %1346 = vmatprep.subr.mxu0 0.0
  %v1347 = vand.u32 %v751, 4294901760
  %1348 = vmatpush1.msra.mxu0 %v1347
  %1349 = vmatprep.subr.mxu0 0.0
  %v1350 = vand.u32 %v752, 4294901760
  %1351 = vmatpush1.msra.mxu0 %v1350
  %1352 = vmatprep.subr.mxu0 0.0
  %v1353 = vand.u32 %v753, 4294901760
  %1354 = vmatpush1.msra.mxu0 %v1353
  %1355 = vmatprep.subr.mxu0 0.0
  %v1356 = vand.u32 %v754, 4294901760
  %1357 = vmatpush1.msra.mxu0 %v1356
  %1358 = vmatprep.subr.mxu0 0.0
  %v1359 = vand.u32 %v755, 4294901760
  %1360 = vmatpush1.msra.mxu0 %v1359
  %1361 = vmatprep.subr.mxu0 0.0
  %v1362 = vand.u32 %v756, 4294901760
  %1363 = vmatpush1.msra.mxu0 %v1362
  %1364 = vmatprep.subr.mxu0 0.0
  %v1365 = vand.u32 %v757, 4294901760
  %1366 = vmatpush1.msra.mxu0 %v1365
  %1367 = vmatprep.subr.mxu0 0.0
  %1368 = vmatpush1.msra.mxu0 0.0
  %1369 = vmatprep.subr.mxu0 0.0
  %1370 = vmatpush1.msra.mxu0 0.0
  %1371 = vmatprep.subr.mxu0 0.0
  %1372 = vmatpush1.msra.mxu0 0.0
  %1373 = vmatprep.subr.mxu0 0.0
  %1374 = vmatpush1.msra.mxu0 0.0
  %1375 = vmatprep.subr.mxu0 0.0
  %1376 = vmatpush1.msra.mxu0 0.0
  %1377 = vmatprep.subr.mxu0 0.0
  %1378 = vmatpush1.msra.mxu0 0.0
  %1379 = vmatprep.subr.mxu0 0.0
  %1380 = vmatpush1.msra.mxu0 0.0
  %1381 = vmatprep.subr.mxu0 0.0
  %1382 = vmatpush1.msra.mxu0 0.0
  %1383 = vmatprep.subr.mxu0 0.0
  %1384 = vmatpush1.msra.mxu0 0.0
  %1385 = vmatprep.subr.mxu0 0.0
  %1386 = vmatpush1.msra.mxu0 0.0
  %1387 = vmatprep.subr.mxu0 0.0
  %1388 = vmatpush1.msra.mxu0 0.0
  %1389 = vmatprep.subr.mxu0 0.0
  %1390 = vmatpush1.msra.mxu0 0.0
  %1391 = vmatprep.subr.mxu0 0.0
  %1392 = vmatpush1.msra.mxu0 0.0
  %1393 = vmatprep.subr.mxu0 0.0
  %1394 = vmatpush1.msra.mxu0 0.0
  %1395 = vmatprep.subr.mxu0 0.0
  %1396 = vmatpush1.msra.mxu0 0.0
  %1397 = vmatprep.subr.mxu0 0.0
  %1398 = vmatpush1.msra.mxu0 0.0
  %1399 = vmatprep.mubr.f32.mxu0 0.0
  %v1400 = vand.u32 %v741, 4294901760
  %1401 = vmatmul.mubr.f32.gmra.mrb[0].mxu0 %v1400
  %v1402 = vpop.f32.mrb[0].mxu0
  %v1403 = vadd.f32 %v1316, %v1402
  %v1404 = vpop.f32.mrb[0].mxu0
  %1405 = vdwg.mxu0
  %vm1406 = vcmask 15360
  %1407 = vst.msk [vmem:[%s7] sm:$0xff] %vm1406, %v1403
  // Predicated region
  $region30: #{tpu_custom_call.1} parent=0 // pred_check
    _
  $region31: #{tpu_custom_call.1} parent=0 // pred_check_branch
    %1409 = sbr.rel (0) target = $region33
  $region32: #{tpu_custom_call.1} parent=0 // pred_region
    _
  $region33: #{tpu_custom_call.1} parent=0 // pred_fallthru
    _
  // Predicated region
  $region34: #{tpu_custom_call.1} parent=0 // pred_check
    _
  $region35: #{tpu_custom_call.1} parent=0 // pred_check_branch
    %1411 = sbr.rel (0) target = $region37
  $region36: #{tpu_custom_call.1} parent=0 // pred_region
    _
  $region37: #{tpu_custom_call.1} parent=0 // pred_fallthru
    _

</llo_original>
